<compile_context>
chip_gen: v7x
topology: tpu7x:2x2x1
jax: 0.10.0
libtpu: 0.0.40
codegen_flags: <defaults>
</compile_context>

<pallas_src>
import functools
import math

import jax
import jax.numpy as jnp
from jax import lax
from jax.experimental import pallas as pl
from jax.experimental.pallas import tpu as pltpu


_VMEM_LIMIT = 32 * 1024 * 1024      # explicit scoped-VMEM limit (safe on v5e/v6e/v7x)
_TILE_BUDGET = 16 * 1024 * 1024     # target bytes of live (double-buffered) blocks


def _round_down_8(n):
    return max(8, (n // 8) * 8)


def _choose_row_tile(m, d_in, d_o, budget=_TILE_BUDGET):
    """Row tile for the projection matmuls (weights fully resident in VMEM)."""
    fixed = 8 * d_in * d_o                     # double-buffered f32 weight block
    per_row = 8 * (d_in + d_o)                 # double-buffered f32 input+output rows
    tm = (budget - fixed) // max(per_row, 1)
    tm = min(_round_down_8(tm), 1024)
    return m if tm >= m else int(tm)


def _choose_q_tile(l_x, l_z, d_attn, d_out, budget=_TILE_BUDGET):
    """Query tile for the attention kernel (K/V for one batch fully resident)."""
    fixed = 8 * l_z * (d_attn + d_out)              # K, V blocks (double-buffered f32)
    per_row = 8 * (3 * l_z + d_attn + d_out)        # mask+score+attn rows + q + vtilde
    tq = (budget - fixed) // max(per_row, 1)
    tq = _round_down_8(tq)
    return l_x if tq >= l_x else int(tq)


# ----------------------------- projection kernels -----------------------------

def _proj_q_kernel(x_ref, w_ref, b_ref, q_ref):
    q_ref[...] = (
        jnp.dot(x_ref[...], w_ref[...], preferred_element_type=jnp.float32)
        + b_ref[...]
    ).astype(q_ref.dtype)


def _proj_kv_kernel(z_ref, w_ref, b_ref, k_ref, v_ref, *, d_attn):
    # One MXU matmul for both K and V (weights concatenated along the output dim).
    kv = (jnp.dot(z_ref[...], w_ref[...], preferred_element_type=jnp.float32)
          + b_ref[...])
    k_ref[...] = kv[:, :d_attn].astype(k_ref.dtype)
    v_ref[...] = kv[:, d_attn:].astype(v_ref.dtype)


def _project_q(x_flat, wq, bq):
    m, d_in = x_flat.shape
    d_o = wq.shape[1]
    tm = _choose_row_tile(m, d_in, d_o)
    return pl.pallas_call(
        _proj_q_kernel,
        out_shape=jax.ShapeDtypeStruct((m, d_o), jnp.float32),
        grid=(pl.cdiv(m, tm),),
        in_specs=[
            pl.BlockSpec((tm, d_in), lambda i: (i, 0)),
            pl.BlockSpec((d_in, d_o), lambda i: (0, 0)),
            pl.BlockSpec((1, d_o), lambda i: (0, 0)),
        ],
        out_specs=pl.BlockSpec((tm, d_o), lambda i: (i, 0)),
        compiler_params=pltpu.CompilerParams(
            dimension_semantics=("parallel",),
            vmem_limit_bytes=_VMEM_LIMIT),
    )(x_flat, wq, bq)


def _project_kv(z_flat, wkv, bkv, d_attn, d_out):
    m, d_in = z_flat.shape
    d_kv = d_attn + d_out
    tm = _choose_row_tile(m, d_in, d_kv)
    kernel = functools.partial(_proj_kv_kernel, d_attn=d_attn)
    return pl.pallas_call(
        kernel,
        out_shape=(jax.ShapeDtypeStruct((m, d_attn), jnp.float32),
                   jax.ShapeDtypeStruct((m, d_out), jnp.float32)),
        grid=(pl.cdiv(m, tm),),
        in_specs=[
            pl.BlockSpec((tm, d_in), lambda i: (i, 0)),
            pl.BlockSpec((d_in, d_kv), lambda i: (0, 0)),
            pl.BlockSpec((1, d_kv), lambda i: (0, 0)),
        ],
        out_specs=(pl.BlockSpec((tm, d_attn), lambda i: (i, 0)),
                   pl.BlockSpec((tm, d_out), lambda i: (i, 0))),
        compiler_params=pltpu.CompilerParams(
            dimension_semantics=("parallel",),
            vmem_limit_bytes=_VMEM_LIMIT),
    )(z_flat, wkv, bkv)


# ------------------------------ attention kernel -------------------------------

def _attn_kernel(q_ref, k_ref, v_ref, mask_ref,
                 score_ref, attn_ref, vt_ref, *, scale):
    q = q_ref[0]          # (tq, d_attn)
    k = k_ref[0]          # (l_z, d_attn)
    v = v_ref[0]          # (l_z, d_out)
    m = mask_ref[0]       # (tq, l_z), float 0/1

    # score = (q @ k^T) * scale — contract the last dims directly (no transpose copy).
    score = lax.dot_general(
        q, k, dimension_numbers=(((1,), (1,)), ((), ())),
        preferred_element_type=jnp.float32) * scale

    # masked_fill(~mask, finfo.min) — the module returns this masked score.
    neg_min = jnp.finfo(jnp.float32).min
    score_masked = jnp.where(m > 0.0, score, neg_min)

    # softmax along last dim (f32), then * mask.
    s_max = jnp.max(score_masked, axis=-1, keepdims=True)
    e = jnp.exp(score_masked - s_max)
    denom = jnp.sum(e, axis=-1, keepdims=True)
    attn = (e * pl.reciprocal(denom, approx=False)) * m

    # TODO(synk): nn.Dropout(p=0.1) is identity (eval mode); stochastic dropout would
    # need pltpu.prng_seed/prng_random_bits and break exact parity with the reference.

    vt = jnp.dot(attn, v, preferred_element_type=jnp.float32)

    score_ref[0] = score_masked.astype(score_ref.dtype)
    attn_ref[0] = attn.astype(attn_ref.dtype)
    vt_ref[0] = vt.astype(vt_ref.dtype)


# --------------------------------- wrapper --------------------------------------

def single_head_attention(x, z, mask, params, d_attn):
    """params: dict with wq (d_x,d_attn), bq (1,d_attn), wk (d_z,d_attn),
    bk (1,d_attn), wv (d_z,d_out), bv (1,d_out)."""
    b, l_x, d_x = x.shape
    _, l_z, d_z = z.shape
    d_out = params["wv"].shape[1]
    scale = 1.0 / math.sqrt(d_attn)

    # --- Hoisted projections: fold (batch, seq) into the matmul M dim. ---
    x_flat = x.reshape(b * l_x, d_x)
    z_flat = z.reshape(b * l_z, d_z)
    wkv = jnp.concatenate([params["wk"], params["wv"]], axis=1)   # (d_z, d_attn+d_out)
    bkv = jnp.concatenate([params["bk"], params["bv"]], axis=1)   # (1, d_attn+d_out)

    q_flat = _project_q(x_flat, params["wq"], params["bq"])
    k_flat, v_flat = _project_kv(z_flat, wkv, bkv, d_attn, d_out)

    q = q_flat.reshape(b, l_x, d_attn)
    k = k_flat.reshape(b, l_z, d_attn)
    v = v_flat.reshape(b, l_z, d_out)

    # --- Attention: grid over (batch, query tile); K/V for a batch held in VMEM. ---
    # TODO(synk): for very long l_z (K/V no longer fitting VMEM) this would need a
    # flash-style kv grid axis with online softmax; not done because `score` and
    # `attention` are module outputs and require the full (l_x, l_z) row anyway.
    tq = _choose_q_tile(l_x, l_z, d_attn, d_out)
    grid = (b, pl.cdiv(l_x, tq))
    kernel = functools.partial(_attn_kernel, scale=scale)

    score, attn, vt = pl.pallas_call(
        kernel,
        out_shape=(jax.ShapeDtypeStruct((b, l_x, l_z), jnp.float32),
                   jax.ShapeDtypeStruct((b, l_x, l_z), jnp.float32),
                   jax.ShapeDtypeStruct((b, l_x, d_out), jnp.float32)),
        grid=grid,
        in_specs=[
            pl.BlockSpec((1, tq, d_attn), lambda i, j: (i, j, 0)),   # q
            pl.BlockSpec((1, l_z, d_attn), lambda i, j: (i, 0, 0)),  # k (reused over j)
            pl.BlockSpec((1, l_z, d_out), lambda i, j: (i, 0, 0)),   # v (reused over j)
            pl.BlockSpec((1, tq, l_z), lambda i, j: (i, j, 0)),      # mask
        ],
        out_specs=(pl.BlockSpec((1, tq, l_z), lambda i, j: (i, j, 0)),    # score
                   pl.BlockSpec((1, tq, l_z), lambda i, j: (i, j, 0)),    # attention
                   pl.BlockSpec((1, tq, d_out), lambda i, j: (i, j, 0))),  # vtilde
        compiler_params=pltpu.CompilerParams(
            dimension_semantics=("parallel", "parallel"),
            vmem_limit_bytes=_VMEM_LIMIT),
    )(q, k, v, mask)

    return {"q": q, "k": k, "v": v, "score": score,
            "attention": attn, "vtilde": vt}


# ------------------------------ init / reference --------------------------------

def init_params(key, d_x, d_z, d_attn, d_out):
    """Deterministic init mimicking nn.Linear (uniform +/- 1/sqrt(fan_in)).
    Weights stored transposed: (d_in, d_out)."""
    ks = jax.random.split(key, 6)

    def lin(kw, kb, d_in, d_o):
        bound = 1.0 / math.sqrt(d_in)
        w = jax.random.uniform(kw, (d_in, d_o), jnp.float32, -bound, bound)
        bias = jax.random.uniform(kb, (1, d_o), jnp.float32, -bound, bound)
        return w, bias

    wq, bq = lin(ks[0], ks[1], d_x, d_attn)
    wk, bk = lin(ks[2], ks[3], d_z, d_attn)
    wv, bv = lin(ks[4], ks[5], d_z, d_out)
    return {"wq": wq, "bq": bq, "wk": wk, "bk": bk, "wv": wv, "bv": bv}


def reference(x, z, mask, params, d_attn):
    scale = 1.0 / math.sqrt(d_attn)
    q = x @ params["wq"] + params["bq"]
    k = z @ params["wk"] + params["bk"]
    v = z @ params["wv"] + params["bv"]
    score = jnp.einsum("bik,bjk->bij", q, k) * scale
    # The PyTorch module returns the masked-filled score.
    score = jnp.where(mask > 0, score, jnp.finfo(jnp.float32).min)
    attn = jax.nn.softmax(score, axis=-1) * mask
    vt = jnp.einsum("bij,bjk->bik", attn, v)
    return {"q": q, "k": k, "v": v, "score": score, "attention": attn, "vtilde": vt}


if __name__ == "__main__":
    key = jax.random.PRNGKey(0)
    b, l_x, l_z = 2, 8, 8
    d_x, d_z, d_attn, d_out = 16, 16, 32, 32

    kx, kz, km, kp = jax.random.split(key, 4)
    x = jax.random.normal(kx, (b, l_x, d_x), jnp.float32)
    z = jax.random.normal(kz, (b, l_z, d_z), jnp.float32)
    mask = (jax.random.uniform(km, (b, l_x, l_z)) > 0.3).astype(jnp.float32)
    # Guarantee at least one valid key per query row (avoid all-masked rows).
    mask = mask.at[:, :, 0].set(1.0)

    params = init_params(kp, d_x, d_z, d_attn, d_out)

    out = single_head_attention(x, z, mask, params, d_attn)
    jax.block_until_ready(out)

    ref = reference(x, z, mask, params, d_attn)
    for name in ("q", "k", "v", "score", "attention", "vtilde"):
        assert jnp.allclose(out[name], ref[name], atol=1e-4, rtol=1e-4), name

    print("KERNEL_OK")
</pallas_src>

<mosaic_0001>
module attributes {stable_mosaic.version = 11 : i64} {
  func.func @_proj_q_kernel(%arg0: i32, %arg1: memref<16x16xf32, #tpu.memory_space<vmem>>, %arg2: memref<16x32xf32, #tpu.memory_space<vmem>>, %arg3: memref<1x32xf32, #tpu.memory_space<vmem>>, %arg4: memref<16x32xf32, #tpu.memory_space<vmem>>) attributes {dimension_semantics = [#tpu.dimension_semantics<parallel>], iteration_bounds = array<i64: 1>, scalar_prefetch = 0 : i64, scratch_operands = 0 : i64, tpu.core_type = #tpu.core_type<tc>, window_params = [{transform_indices = @transform_0, window_bounds = array<i64: 16, 16>}, {pipeline_mode = #tpu.pipeline_mode<synchronous>, transform_indices = @transform_1, window_bounds = array<i64: 16, 32>}, {pipeline_mode = #tpu.pipeline_mode<synchronous>, transform_indices = @transform_2, window_bounds = array<i64: 1, 32>}, {transform_indices = @transform_3, window_bounds = array<i64: 16, 32>}]} {
    %c0 = arith.constant 0 : index
    %c0_0 = arith.constant 0 : index
    %0 = vector.load %arg1[%c0, %c0_0] : memref<16x16xf32, #tpu.memory_space<vmem>>, vector<16x16xf32>
    %c0_1 = arith.constant 0 : index
    %c0_2 = arith.constant 0 : index
    %1 = vector.load %arg2[%c0_1, %c0_2] : memref<16x32xf32, #tpu.memory_space<vmem>>, vector<16x32xf32>
    %cst = arith.constant dense<0.000000e+00> : vector<16x32xf32>
    %2 = tpu.matmul %0, %1, %cst {dimension_numbers = #tpu.dot_dimension_numbers<[1], [0], [0], [1], [0, 0, 1, 1], [], []>} : vector<16x16xf32>, vector<16x32xf32>, vector<16x32xf32> -> vector<16x32xf32>
    %c0_3 = arith.constant 0 : index
    %c0_4 = arith.constant 0 : index
    %3 = vector.load %arg3[%c0_3, %c0_4] : memref<1x32xf32, #tpu.memory_space<vmem>>, vector<1x32xf32>
    %4 = vector.broadcast %3 : vector<1x32xf32> to vector<16x32xf32>
    %5 = arith.addf %2, %4 : vector<16x32xf32>
    %c0_5 = arith.constant 0 : index
    %c0_6 = arith.constant 0 : index
    %6 = vector.load %arg4[%c0_5, %c0_6] : memref<16x32xf32, #tpu.memory_space<vmem>>, vector<16x32xf32>
    tpu.vector_store %arg4[%c0_5, %c0_6], %5 {strides = array<i32>} : memref<16x32xf32, #tpu.memory_space<vmem>>, vector<16x32xf32>,
    return
  }
  func.func @transform_0(%arg0: i32) -> (i32, i32) {
    %c0_i32 = arith.constant 0 : i32
    %c0_i32_0 = arith.constant 0 : i32
    return %arg0, %c0_i32 : i32, i32
  }
  func.func @transform_1(%arg0: i32) -> (i32, i32) {
    %c0_i32 = arith.constant 0 : i32
    %c0_i32_0 = arith.constant 0 : i32
    %c0_i32_1 = arith.constant 0 : i32
    return %c0_i32, %c0_i32_0 : i32, i32
  }
  func.func @transform_2(%arg0: i32) -> (i32, i32) {
    %c0_i32 = arith.constant 0 : i32
    %c0_i32_0 = arith.constant 0 : i32
    %c0_i32_1 = arith.constant 0 : i32
    return %c0_i32, %c0_i32_0 : i32, i32
  }
  func.func @transform_3(%arg0: i32) -> (i32, i32) {
    %c0_i32 = arith.constant 0 : i32
    %c0_i32_0 = arith.constant 0 : i32
    return %arg0, %c0_i32 : i32, i32
  }
}

</mosaic_0001>

<llo_original>
// kernel: tpu_custom_call.1
$region0: #{tpu_custom_call.1}
  #allocation0 [shape = 'u32[]', space=smem, size = 0x4, offset = 0x4, fixed_abs, tag = 'smem constant byte address 0x4 - core index']
  #allocation1 [shape = 'u32[144,128]{1,0:T(1,128)}', space=vmem, size = 0x12000, scoped, tag = 'internal scratch']
  %s0 = inlined_call_operand.hbm [shape: f32[16,16], index: 0, kind: input, shape index: {}]
  %s1 = inlined_call_operand.hbm [shape: f32[16,32], index: 1, kind: input, shape index: {}]
  %s2 = inlined_call_operand.vmem [shape: f32[1,32], index: 2, kind: input, shape index: {}]
  %s3 = inlined_call_operand.hbm [shape: f32[16,32], index: 3, kind: output, shape index: {}]
  %s4 = sld [smem:[#allocation0]]
  $region30: #{tpu_custom_call.1} parent=0
    _
  %s6 = ssub.s32 1, %s4
  %s7 = scalar_select 0, %s6, %s4
  $region1: #{tpu_custom_call.1} parent=0
    #allocation2 [shape = 'u8[8192]{0}', space=vmem, size = 0x2000, scoped, tag = 'input window, operand 0, single buffered']
    #allocation3 [shape = 's32[1]{0}', space=sflag, size = 0x4, scoped, tag = 'scoped memory for tpu_custom_call.1']
    #allocation4 [shape = 's32[1]{0}', space=sflag, size = 0x4, scoped, tag = 'scoped memory for tpu_custom_call.1']
    #allocation5 [shape = 'u8[8192]{0}', space=vmem, size = 0x2000, scoped, tag = 'input window, operand 1, single buffered']
    #allocation6 [shape = 's32[1]{0}', space=sflag, size = 0x4, scoped, tag = 'scoped memory for tpu_custom_call.1']
    #allocation7 [shape = 'u8[8192]{0}', space=vmem, size = 0x2000, scoped, tag = 'output window, operand 0, single buffered']
    %8 = vsyncpa [#allocation3], 0
    %9 = vsyncpa [#allocation6], 0
    %10 = vsyncpa [#allocation4], 0
    // Predicated region
    $region2: #{tpu_custom_call.1} parent=1 // pred_check
      _
    $region3: #{tpu_custom_call.1} parent=1 // pred_check_branch
      %12 = sbr.rel (0) target = $region5
    $region4: #{tpu_custom_call.1} parent=1 // pred_region
      %s14 = ssub.s32 256, 256
      %15 = vsyncadd [#allocation3], %s14
      %s16 = sshll.u32 [#allocation2], 4
      %s17 = int_to_ptr.vmem [resolvable:$true] %s16
      %22 = dma.hbm_to_vmem [thread:$0]  %s0, 256, %s17, [#allocation3], 128, 128, 8
    $region5: #{tpu_custom_call.1} parent=1 // pred_fallthru
      _
    // Predicated region
    $region6: #{tpu_custom_call.1} parent=1 // pred_check
      _
    $region7: #{tpu_custom_call.1} parent=1 // pred_check_branch
      %24 = sbr.rel (0) target = $region9
    $region8: #{tpu_custom_call.1} parent=1 // pred_region
      %s26 = ssub.s32 256, 256
      %27 = vsyncadd [#allocation6], %s26
      %s28 = sshll.u32 [#allocation5], 4
      %s29 = int_to_ptr.vmem [resolvable:$true] %s28
      %34 = dma.hbm_to_vmem [thread:$0]  %s1, 256, %s29, [#allocation6], 128, 128, 8
    $region9: #{tpu_custom_call.1} parent=1 // pred_fallthru
      _
    // Predicated region
    $region10: #{tpu_custom_call.1} parent=1 // pred_check
      _
    $region11: #{tpu_custom_call.1} parent=1 // pred_check_branch
      %36 = sbr.rel (0) target = $region13
    $region12: #{tpu_custom_call.1} parent=1 // pred_region
      _
    $region13: #{tpu_custom_call.1} parent=1 // pred_fallthru
      _
    // Predicated region
    $region14: #{tpu_custom_call.1} parent=1 // pred_check
      _
    $region15: #{tpu_custom_call.1} parent=1 // pred_check_branch
      %38 = sbr.rel (0) target = $region17
    $region16: #{tpu_custom_call.1} parent=1 // pred_region
      %39 = dma.done [#allocation3], 256
    $region17: #{tpu_custom_call.1} parent=1 // pred_fallthru
      _
    // Predicated region
    $region18: #{tpu_custom_call.1} parent=1 // pred_check
      _
    $region19: #{tpu_custom_call.1} parent=1 // pred_check_branch
      %41 = sbr.rel (0) target = $region21
    $region20: #{tpu_custom_call.1} parent=1 // pred_region
      %42 = dma.done [#allocation6], 256
    $region21: #{tpu_custom_call.1} parent=1 // pred_fallthru
      _
    %v43 = vld [vmem:[#allocation2] sm:$0xff]
    %v44 = vld [vmem:[#allocation2 + $0x8] sm:$0xff]
    %v45 = vld [vmem:[#allocation5] sm:$0xff]
    %v46 = vld [vmem:[#allocation5 + $0x8] sm:$0xff]
    %v47 = vld [vmem:[%s2] sm:$0x1]
    %v49 = vlaneseq
    %v50 = vshrl.u32 %v49, 7
    %v51 = vsub.s32 0, %v50
    %v52 = vrot.slane %v47, %v51
    %vm54 = vcmask 130048
    %v56 = vsel %vm54, %v43, 0
    %v59 = vsel %vm54, %v44, 0
    %61 = vmatprep.subr.mxu0 0.0
    %62 = vmatpush1.msra.mxu0 %v45
    %63 = vmatprep.subr.mxu0 0.0
    %64 = vmatpush1.msra.mxu0 %v46
    %65 = vmatprep.subr.mxu0 0.0
    %66 = vmatpush1.msra.mxu0 0.0
    %67 = vmatprep.subr.mxu0 0.0
    %68 = vmatpush1.msra.mxu0 0.0
    %69 = vmatprep.subr.mxu0 0.0
    %70 = vmatpush1.msra.mxu0 0.0
    %71 = vmatprep.subr.mxu0 0.0
    %72 = vmatpush1.msra.mxu0 0.0
    %73 = vmatprep.subr.mxu0 0.0
    %74 = vmatpush1.msra.mxu0 0.0
    %75 = vmatprep.subr.mxu0 0.0
    %76 = vmatpush1.msra.mxu0 0.0
    %77 = vmatprep.subr.mxu0 0.0
    %78 = vmatpush1.msra.mxu0 0.0
    %79 = vmatprep.subr.mxu0 0.0
    %80 = vmatpush1.msra.mxu0 0.0
    %81 = vmatprep.subr.mxu0 0.0
    %82 = vmatpush1.msra.mxu0 0.0
    %83 = vmatprep.subr.mxu0 0.0
    %84 = vmatpush1.msra.mxu0 0.0
    %85 = vmatprep.subr.mxu0 0.0
    %86 = vmatpush1.msra.mxu0 0.0
    %87 = vmatprep.subr.mxu0 0.0
    %88 = vmatpush1.msra.mxu0 0.0
    %89 = vmatprep.subr.mxu0 0.0
    %90 = vmatpush1.msra.mxu0 0.0
    %91 = vmatprep.subr.mxu0 0.0
    %92 = vmatpush1.msra.mxu0 0.0
    %93 = vmatprep.subr.mxu0 0.0
    %94 = vmatpush1.msra.mxu0 0.0
    %95 = vmatprep.subr.mxu0 0.0
    %96 = vmatpush1.msra.mxu0 0.0
    %97 = vmatprep.subr.mxu0 0.0
    %98 = vmatpush1.msra.mxu0 0.0
    %99 = vmatprep.subr.mxu0 0.0
    %100 = vmatpush1.msra.mxu0 0.0
    %101 = vmatprep.subr.mxu0 0.0
    %102 = vmatpush1.msra.mxu0 0.0
    %103 = vmatprep.subr.mxu0 0.0
    %104 = vmatpush1.msra.mxu0 0.0
    %105 = vmatprep.subr.mxu0 0.0
    %106 = vmatpush1.msra.mxu0 0.0
    %107 = vmatprep.subr.mxu0 0.0
    %108 = vmatpush1.msra.mxu0 0.0
    %109 = vmatprep.subr.mxu0 0.0
    %110 = vmatpush1.msra.mxu0 0.0
    %111 = vmatprep.subr.mxu0 0.0
    %112 = vmatpush1.msra.mxu0 0.0
    %113 = vmatprep.subr.mxu0 0.0
    %114 = vmatpush1.msra.mxu0 0.0
    %115 = vmatprep.subr.mxu0 0.0
    %116 = vmatpush1.msra.mxu0 0.0
    %117 = vmatprep.subr.mxu0 0.0
    %118 = vmatpush1.msra.mxu0 0.0
    %119 = vmatprep.subr.mxu0 0.0
    %120 = vmatpush1.msra.mxu0 0.0
    %121 = vmatprep.subr.mxu0 0.0
    %122 = vmatpush1.msra.mxu0 0.0
    %123 = vmatprep.subr.mxu0 0.0
    %124 = vmatpush1.msra.mxu0 0.0
    %125 = vmatprep.mubr.f32.mxu0 0.0
    %126 = vmatmul.mubr.f32.gmra.mrb[0].mxu0 %v56
    %v127 = vpop.f32.mrb[0].mxu0
    %v128 = vadd.f32 %v52, %v127
    %v129 = vpop.f32.mrb[0].mxu0
    %130 = vmatprep.mubr.f32.mxu0 0.0
    %131 = vmatmul.mubr.f32.gmra.mrb[0].mxu0 %v59
    %v132 = vpop.f32.mrb[0].mxu0
    %v133 = vadd.f32 %v52, %v132
    %v134 = vpop.f32.mrb[0].mxu0
    %135 = vdwg.mxu0
    %vm136 = vcmask 261120
    %137 = vst.msk [vmem:[#allocation7] sm:$0xff] %vm136, %v128
    %138 = vst.msk [vmem:[#allocation7 + $0x8] sm:$0xff] %vm136, %v133
    // Predicated region
    $region22: #{tpu_custom_call.1} parent=1 // pred_check
      _
    $region23: #{tpu_custom_call.1} parent=1 // pred_check_branch
      %140 = sbr.rel (0) target = $region25
    $region24: #{tpu_custom_call.1} parent=1 // pred_region
      %s142 = ssub.s32 256, 256
      %143 = vsyncadd [#allocation4], %s142
      %s144 = sshll.u32 [#allocation7], 4
      %s145 = int_to_ptr.vmem [resolvable:$true] %s144
      %150 = dma.vmem_to_hbm [thread:$0]  %s145, 256, %s3, [#allocation4], 128, 128, 8
    $region25: #{tpu_custom_call.1} parent=1 // pred_fallthru
      _
    // Predicated region
    $region26: #{tpu_custom_call.1} parent=1 // pred_check
      _
    $region27: #{tpu_custom_call.1} parent=1 // pred_check_branch
      %152 = sbr.rel (0) target = $region29
    $region28: #{tpu_custom_call.1} parent=1 // pred_region
      %153 = dma.done [#allocation4], 256
    $region29: #{tpu_custom_call.1} parent=1 // pred_fallthru
      _
    %154 = vsyncpa [#allocation3], 1
    %155 = vsyncpa [#allocation6], 1
    %156 = vsyncpa [#allocation4], 1

</llo_original>
